<compile_context>
chip_gen: v7x
topology: tpu7x:2x2x1
jax: 0.10.0
libtpu: 0.0.40
codegen_flags: <defaults>
</compile_context>

<pallas_src>
import functools

import jax
import jax.numpy as jnp
from jax import lax
from jax.experimental import pallas as pl
from jax.experimental.pallas import tpu as pltpu


# ---------------------------------------------------------------------------
# Kernel 1: GCN + BN(eval) + ReLU (+ dropout identity) + GRU input preactivations.
# Grid: (node-row tiles [parallel], node-col tiles [arbitrary / reduction]).
# ---------------------------------------------------------------------------
def _gcn_xg_kernel(a_ref, x_ref, w_ref, b_ref,
                   gamma_ref, beta_ref, rmean_ref, rvar_ref,
                   wih_r_ref, wih_z_ref, wih_n_ref,
                   bih_r_ref, bih_z_ref, bih_n_ref,
                   xg_r_ref, xg_z_ref, xg_n_ref,
                   acc_ref):
    k = pl.program_id(1)

    @pl.when(k == 0)
    def _():
        acc_ref[...] = jnp.zeros_like(acc_ref)

    # Accumulate A_hat @ X.  Reassociation (A @ X) @ W == A @ (X @ W) lets the
    # reduction loop do only one tm x tk x cin matmul per grid point and avoids
    # recomputing X @ W once per row tile (the previous version's redundancy).
    acc_ref[...] += jnp.dot(a_ref[...], x_ref[...].astype(jnp.bfloat16),
                            preferred_element_type=jnp.float32)

    @pl.when(k == pl.num_programs(1) - 1)
    def _():
        # (A_hat @ X) @ W + bias — once per row tile.
        h_gcn = jnp.dot(acc_ref[...].astype(jnp.bfloat16), w_ref[...],
                        preferred_element_type=jnp.float32) + b_ref[...]
        # BatchNorm (eval, running stats) + ReLU; dropout is identity in eval.
        inv_std = lax.rsqrt(rvar_ref[...] + 1e-5)
        xb = (h_gcn - rmean_ref[...]) * inv_std * gamma_ref[...] + beta_ref[...]
        xr = jnp.maximum(xb, 0.0).astype(jnp.bfloat16)
        # Per-gate GRU input preactivations: each gate gets its own lane-aligned
        # output so the serial scan never slices inside a vreg at lane 32/64.
        xg_r_ref[...] = (jnp.dot(xr, wih_r_ref[...],
                                 preferred_element_type=jnp.float32)
                         + bih_r_ref[...])
        xg_z_ref[...] = (jnp.dot(xr, wih_z_ref[...],
                                 preferred_element_type=jnp.float32)
                         + bih_z_ref[...])
        xg_n_ref[...] = (jnp.dot(xr, wih_n_ref[...],
                                 preferred_element_type=jnp.float32)
                         + bih_n_ref[...])


# ---------------------------------------------------------------------------
# Kernel 2: serial GRU recurrence over the node/sequence axis.
# ---------------------------------------------------------------------------
def _gru_scan_kernel(xg_r_ref, xg_z_ref, xg_n_ref,
                     whh_r_ref, whh_z_ref, whh_n_ref,
                     bhh_r_ref, bhh_z_ref, bhh_n_ref,
                     h0_ref, out_ref, hn_ref, *, apply_sigmoid):
    n_nodes = xg_r_ref.shape[0]

    # Hoist loop-invariant recurrent weights / biases into vregs once.
    # Recurrent weights stay bf16: one MXU pass per push on the serial critical path.
    whh_r = whh_r_ref[...]
    whh_z = whh_z_ref[...]
    whh_n = whh_n_ref[...]
    bhh_r = bhh_r_ref[...]
    bhh_z = bhh_z_ref[...]
    bhh_n = bhh_n_ref[...]

    def step(t, h):
        # h is a loop carry (vreg-resident, f32): no VMEM store->load per timestep.
        hb = h.astype(jnp.bfloat16)
        # Three independent bf16 MXU pushes issue back-to-back; f32 accumulation.
        hg_r = jnp.dot(hb, whh_r, preferred_element_type=jnp.float32) + bhh_r
        hg_z = jnp.dot(hb, whh_z, preferred_element_type=jnp.float32) + bhh_z
        hg_n = jnp.dot(hb, whh_n, preferred_element_type=jnp.float32) + bhh_n
        # Gate math stays f32 (VPU/EUP path; v5e has no bf16 VPU/EUP).
        r = jax.nn.sigmoid(xg_r_ref[pl.ds(t, 1), :] + hg_r)
        z = jax.nn.sigmoid(xg_z_ref[pl.ds(t, 1), :] + hg_z)
        n = jnp.tanh(xg_n_ref[pl.ds(t, 1), :] + r * hg_n)
        h_new = (1.0 - z) * n + z * h
        if apply_sigmoid:
            # Final sigmoid fused into the per-step store: EUP work off the
            # recurrence critical path (h_new feeds forward un-sigmoided).
            out_ref[pl.ds(t, 1), :] = jax.nn.sigmoid(h_new)
        else:
            out_ref[pl.ds(t, 1), :] = h_new
        return h_new

    h_final = lax.fori_loop(0, n_nodes, step, h0_ref[...], unroll=2)
    hn_ref[...] = h_final


# ---------------------------------------------------------------------------
# Wrappers
# ---------------------------------------------------------------------------
def _pick_node_tiles(n_nodes):
    # Last-dim tile must be a multiple of 128 (or the full extent); second-to-last a
    # multiple of 8 (or full).  Tiles are small enough that (A tile + double buffers +
    # weights + f32 accumulator) stays well under the v7x 64 MiB physical VMEM.
    for t in (512, 256, 128):
        if n_nodes % t == 0:
            return t, t
    return n_nodes, n_nodes


def gcn_xg(a_hat, x, p):
    """GCN + BN + ReLU + GRU input preactivations for one layer (tiled pallas_call)."""
    n_nodes, cin = x.shape
    h_dim = p["w"].shape[1]
    g_dim = p["wih"][0].shape[1]
    tm, tk = _pick_node_tiles(n_nodes)
    grid = (n_nodes // tm, n_nodes // tk)

    def full(shape):
        return pl.BlockSpec(shape, lambda i, k: (0, 0))

    xg_spec = pl.BlockSpec((tm, g_dim), lambda i, k: (i, 0))
    out_shape = tuple(jax.ShapeDtypeStruct((n_nodes, g_dim), jnp.float32)
                      for _ in range(3))

    return pl.pallas_call(
        _gcn_xg_kernel,
        out_shape=out_shape,
        grid_spec=pltpu.PrefetchScalarGridSpec(
            num_scalar_prefetch=0,
            grid=grid,
            in_specs=[
                pl.BlockSpec((tm, tk), lambda i, k: (i, k)),    # A_hat (bf16)
                pl.BlockSpec((tk, cin), lambda i, k: (k, 0)),   # X
                full((cin, h_dim)),                             # W (bf16)
                full((1, h_dim)),                               # GCN bias
                full((1, h_dim)), full((1, h_dim)),             # gamma, beta
                full((1, h_dim)), full((1, h_dim)),             # running mean, var
                full((h_dim, g_dim)), full((h_dim, g_dim)), full((h_dim, g_dim)),  # W_ih per gate (bf16)
                full((1, g_dim)), full((1, g_dim)), full((1, g_dim)),              # b_ih per gate
            ],
            out_specs=(xg_spec, xg_spec, xg_spec),
            scratch_shapes=[pltpu.VMEM((tm, cin), jnp.float32)],
        ),
        compiler_params=pltpu.CompilerParams(
            dimension_semantics=("parallel", "arbitrary")),
    )(a_hat, x, p["w"], p["b"], p["gamma"], p["beta"], p["rmean"], p["rvar"],
      *p["wih"], *p["bih"])


def gru_scan(xg, p, h0, *, apply_sigmoid):
    """Serial GRU recurrence over the node axis (single un-gridded pallas_call)."""
    xg_r, xg_z, xg_n = xg
    n_nodes, g_dim = xg_r.shape
    vmem = pl.BlockSpec(memory_space=pltpu.MemorySpace.VMEM)
    kernel = functools.partial(_gru_scan_kernel, apply_sigmoid=apply_sigmoid)
    out, hn = pl.pallas_call(
        kernel,
        out_shape=(jax.ShapeDtypeStruct((n_nodes, g_dim), jnp.float32),
                   jax.ShapeDtypeStruct((1, g_dim), jnp.float32)),
        in_specs=[vmem] * 10,
        out_specs=(vmem, vmem),
    )(xg_r, xg_z, xg_n, *p["whh"], *p["bhh"], h0)
    return out, hn


def build_normalized_adjacency(edge_index, num_nodes):
    """Dense GCN propagation matrix D^{-1/2} (A + I) D^{-1/2} (glue, plain JAX).

    Note: duplicate edges accumulate (matches PyG message passing with unit weights).
    """
    src, dst = edge_index[0], edge_index[1]
    adj = jnp.zeros((num_nodes, num_nodes), jnp.float32).at[dst, src].add(1.0)
    adj = adj + jnp.eye(num_nodes, dtype=jnp.float32)
    deg = jnp.sum(adj, axis=1)
    dinv = lax.rsqrt(deg)
    return dinv[:, None] * adj * dinv[None, :]


def init_params(key, num_features, hidden_dims, gru_hidden_dims, n_layers):
    params = []
    for layer in range(n_layers):
        fin = num_features if layer == 0 else gru_hidden_dims[layer - 1]
        h_dim = hidden_dims[layer]
        g_dim = gru_hidden_dims[layer]
        key, *ks = jax.random.split(key, 19)
        p = dict(
            # MXU-side weights stored bf16 (f32 accumulation in-kernel).
            w=(0.1 * jax.random.normal(ks[0], (fin, h_dim), jnp.float32)
               ).astype(jnp.bfloat16),                                       # GCN weight
            b=0.1 * jax.random.normal(ks[1], (1, h_dim), jnp.float32),       # GCN bias
            gamma=1.0 + 0.1 * jax.random.normal(ks[2], (1, h_dim), jnp.float32),
            beta=0.1 * jax.random.normal(ks[3], (1, h_dim), jnp.float32),
            rmean=0.1 * jax.random.normal(ks[4], (1, h_dim), jnp.float32),   # BN running mean
            rvar=1.0 + 0.05 * jax.random.uniform(ks[5], (1, h_dim), jnp.float32),  # BN running var
            # Per-gate GRU parameters, gate order [r, z, n] (PyTorch layout, split).
            wih=tuple((0.1 * jax.random.normal(ks[6 + i], (h_dim, g_dim), jnp.float32)
                       ).astype(jnp.bfloat16) for i in range(3)),
            bih=tuple(0.1 * jax.random.normal(ks[9 + i], (1, g_dim), jnp.float32)
                      for i in range(3)),
            whh=tuple((0.1 * jax.random.normal(ks[12 + i], (g_dim, g_dim), jnp.float32)
                       ).astype(jnp.bfloat16) for i in range(3)),
            bhh=tuple(0.1 * jax.random.normal(ks[15 + i], (1, g_dim), jnp.float32)
                      for i in range(3)),
        )
        params.append(p)
    return params


def single_anomuly_forward(x, edge_index, params, hiddens=None):
    n_layers = len(params)
    num_nodes = x.shape[0]
    # A_hat computed once and cast to bf16 (halves HBM traffic for the dominant input).
    # TODO(synk): pin A_hat across layers so it is DMA'd from HBM only once; the serial
    # cross-layer GRU dependency prevents a trivial single-call fusion of all layers.
    a_hat = build_normalized_adjacency(edge_index, num_nodes).astype(jnp.bfloat16)
    if hiddens is None:
        hiddens = [jnp.zeros((1, params[l]["whh"][0].shape[0]), jnp.float32)
                   for l in range(n_layers)]
    new_hiddens = []
    for layer in range(n_layers):
        p = params[layer]
        xg = gcn_xg(a_hat, x, p)
        x, h = gru_scan(xg, p, hiddens[layer],
                        apply_sigmoid=(layer == n_layers - 1))
        new_hiddens.append(h)
    return jnp.squeeze(x), new_hiddens


if __name__ == "__main__":
    key = jax.random.PRNGKey(0)
    num_nodes, num_features = 16, 8
    hidden_dims = [32, 32]
    gru_hidden_dims = [32, 32]
    n_layers = 2
    num_edges = 24

    k_x, k_src, k_dst, k_p = jax.random.split(key, 4)
    x = jax.random.normal(k_x, (num_nodes, num_features), jnp.float32)
    src = jax.random.randint(k_src, (num_edges,), 0, num_nodes)
    dst = jax.random.randint(k_dst, (num_edges,), 0, num_nodes)
    edge_index = jnp.stack([src, dst], axis=0)

    params = init_params(k_p, num_features, hidden_dims, gru_hidden_dims, n_layers)

    out, hiddens = single_anomuly_forward(x, edge_index, params)
    jax.block_until_ready(out)
    for h in hiddens:
        jax.block_until_ready(h)

    assert out.shape == (num_nodes, gru_hidden_dims[-1])
    assert all(h.shape == (1, gru_hidden_dims[i]) for i, h in enumerate(hiddens))
    assert bool(jnp.all(jnp.isfinite(out)))
    print("KERNEL_OK")
</pallas_src>

<mosaic_0001>
module attributes {stable_mosaic.version = 11 : i64} {
  func.func @_gcn_xg_kernel(%arg0: i32, %arg1: i32, %arg2: memref<16x16xbf16, #tpu.memory_space<vmem>>, %arg3: memref<16x8xf32, #tpu.memory_space<vmem>>, %arg4: memref<8x32xbf16, #tpu.memory_space<vmem>>, %arg5: memref<1x32xf32, #tpu.memory_space<vmem>>, %arg6: memref<1x32xf32, #tpu.memory_space<vmem>>, %arg7: memref<1x32xf32, #tpu.memory_space<vmem>>, %arg8: memref<1x32xf32, #tpu.memory_space<vmem>>, %arg9: memref<1x32xf32, #tpu.memory_space<vmem>>, %arg10: memref<32x32xbf16, #tpu.memory_space<vmem>>, %arg11: memref<32x32xbf16, #tpu.memory_space<vmem>>, %arg12: memref<32x32xbf16, #tpu.memory_space<vmem>>, %arg13: memref<1x32xf32, #tpu.memory_space<vmem>>, %arg14: memref<1x32xf32, #tpu.memory_space<vmem>>, %arg15: memref<1x32xf32, #tpu.memory_space<vmem>>, %arg16: memref<16x32xf32, #tpu.memory_space<vmem>>, %arg17: memref<16x32xf32, #tpu.memory_space<vmem>>, %arg18: memref<16x32xf32, #tpu.memory_space<vmem>>, %arg19: memref<16x8xf32, #tpu.memory_space<vmem>>) attributes {dimension_semantics = [#tpu.dimension_semantics<parallel>, #tpu.dimension_semantics<arbitrary>], iteration_bounds = array<i64: 1, 1>, scalar_prefetch = 0 : i64, scratch_operands = 1 : i64, tpu.core_type = #tpu.core_type<tc>, window_params = [{transform_indices = @transform_0, window_bounds = array<i64: 16, 16>}, {transform_indices = @transform_1, window_bounds = array<i64: 16, 8>}, {pipeline_mode = #tpu.pipeline_mode<synchronous>, transform_indices = @transform_2, window_bounds = array<i64: 8, 32>}, {pipeline_mode = #tpu.pipeline_mode<synchronous>, transform_indices = @transform_3, window_bounds = array<i64: 1, 32>}, {pipeline_mode = #tpu.pipeline_mode<synchronous>, transform_indices = @transform_4, window_bounds = array<i64: 1, 32>}, {pipeline_mode = #tpu.pipeline_mode<synchronous>, transform_indices = @transform_5, window_bounds = array<i64: 1, 32>}, {pipeline_mode = #tpu.pipeline_mode<synchronous>, transform_indices = @transform_6, window_bounds = array<i64: 1, 32>}, {pipeline_mode = #tpu.pipeline_mode<synchronous>, transform_indices = @transform_7, window_bounds = array<i64: 1, 32>}, {pipeline_mode = #tpu.pipeline_mode<synchronous>, transform_indices = @transform_8, window_bounds = array<i64: 32, 32>}, {pipeline_mode = #tpu.pipeline_mode<synchronous>, transform_indices = @transform_9, window_bounds = array<i64: 32, 32>}, {pipeline_mode = #tpu.pipeline_mode<synchronous>, transform_indices = @transform_10, window_bounds = array<i64: 32, 32>}, {pipeline_mode = #tpu.pipeline_mode<synchronous>, transform_indices = @transform_11, window_bounds = array<i64: 1, 32>}, {pipeline_mode = #tpu.pipeline_mode<synchronous>, transform_indices = @transform_12, window_bounds = array<i64: 1, 32>}, {pipeline_mode = #tpu.pipeline_mode<synchronous>, transform_indices = @transform_13, window_bounds = array<i64: 1, 32>}, {transform_indices = @transform_14, window_bounds = array<i64: 16, 32>}, {transform_indices = @transform_15, window_bounds = array<i64: 16, 32>}, {transform_indices = @transform_16, window_bounds = array<i64: 16, 32>}]} {
    %c0_i32 = arith.constant 0 : i32
    %0 = arith.cmpi eq, %arg1, %c0_i32 : i32
    %1 = arith.extui %0 : i1 to i32
    %c0_i32_0 = arith.constant 0 : i32
    %2 = arith.cmpi ne, %1, %c0_i32_0 : i32
    scf.if %2 {
      %cst_10 = arith.constant 0.000000e+00 : f32
      %13 = vector.broadcast %cst_10 : f32 to vector<16x8xf32>
      %c0_11 = arith.constant 0 : index
      %c0_12 = arith.constant 0 : index
      %14 = vector.load %arg19[%c0_11, %c0_12] : memref<16x8xf32, #tpu.memory_space<vmem>>, vector<16x8xf32>
      tpu.vector_store %arg19[%c0_11, %c0_12], %13 {strides = array<i32>} : memref<16x8xf32, #tpu.memory_space<vmem>>, vector<16x8xf32>,
    } else {
    }
    %c0 = arith.constant 0 : index
    %c0_1 = arith.constant 0 : index
    %3 = vector.load %arg19[%c0, %c0_1] : memref<16x8xf32, #tpu.memory_space<vmem>>, vector<16x8xf32>
    %c0_2 = arith.constant 0 : index
    %c0_3 = arith.constant 0 : index
    %4 = vector.load %arg2[%c0_2, %c0_3] : memref<16x16xbf16, #tpu.memory_space<vmem>>, vector<16x16xbf16>
    %c0_4 = arith.constant 0 : index
    %c0_5 = arith.constant 0 : index
    %5 = vector.load %arg3[%c0_4, %c0_5] : memref<16x8xf32, #tpu.memory_space<vmem>>, vector<16x8xf32>
    %6 = arith.truncf %5 : vector<16x8xf32> to vector<16x8xbf16>
    %cst = arith.constant dense<0.000000e+00> : vector<16x8xf32>
    %7 = tpu.matmul %4, %6, %cst {dimension_numbers = #tpu.dot_dimension_numbers<[1], [0], [0], [1], [0, 0, 1, 1], [], []>} : vector<16x16xbf16>, vector<16x8xbf16>, vector<16x8xf32> -> vector<16x8xf32>
    %8 = arith.addf %3, %7 : vector<16x8xf32>
    %c0_6 = arith.constant 0 : index
    %c0_7 = arith.constant 0 : index
    %9 = vector.load %arg19[%c0_6, %c0_7] : memref<16x8xf32, #tpu.memory_space<vmem>>, vector<16x8xf32>
    tpu.vector_store %arg19[%c0_6, %c0_7], %8 {strides = array<i32>} : memref<16x8xf32, #tpu.memory_space<vmem>>, vector<16x8xf32>,
    %c0_i32_8 = arith.constant 0 : i32
    %10 = arith.cmpi eq, %arg1, %c0_i32_8 : i32
    %11 = arith.extui %10 : i1 to i32
    %c0_i32_9 = arith.constant 0 : i32
    %12 = arith.cmpi ne, %11, %c0_i32_9 : i32
    scf.if %12 {
      %c0_10 = arith.constant 0 : index
      %c0_11 = arith.constant 0 : index
      %13 = vector.load %arg19[%c0_10, %c0_11] : memref<16x8xf32, #tpu.memory_space<vmem>>, vector<16x8xf32>
      %14 = arith.truncf %13 : vector<16x8xf32> to vector<16x8xbf16>
      %c0_12 = arith.constant 0 : index
      %c0_13 = arith.constant 0 : index
      %15 = vector.load %arg4[%c0_12, %c0_13] : memref<8x32xbf16, #tpu.memory_space<vmem>>, vector<8x32xbf16>
      %cst_14 = arith.constant dense<0.000000e+00> : vector<16x32xf32>
      %16 = tpu.matmul %14, %15, %cst_14 {dimension_numbers = #tpu.dot_dimension_numbers<[1], [0], [0], [1], [0, 0, 1, 1], [], []>} : vector<16x8xbf16>, vector<8x32xbf16>, vector<16x32xf32> -> vector<16x32xf32>
      %c0_15 = arith.constant 0 : index
      %c0_16 = arith.constant 0 : index
      %17 = vector.load %arg5[%c0_15, %c0_16] : memref<1x32xf32, #tpu.memory_space<vmem>>, vector<1x32xf32>
      %18 = vector.broadcast %17 : vector<1x32xf32> to vector<16x32xf32>
      %19 = arith.addf %16, %18 : vector<16x32xf32>
      %c0_17 = arith.constant 0 : index
      %c0_18 = arith.constant 0 : index
      %20 = vector.load %arg9[%c0_17, %c0_18] : memref<1x32xf32, #tpu.memory_space<vmem>>, vector<1x32xf32>
      %cst_19 = arith.constant 9.99999974E-6 : f32
      %21 = vector.broadcast %cst_19 : f32 to vector<1x32xf32>
      %22 = arith.addf %20, %21 : vector<1x32xf32>
      %23 = math.rsqrt %22 : vector<1x32xf32>
      %c0_20 = arith.constant 0 : index
      %c0_21 = arith.constant 0 : index
      %24 = vector.load %arg8[%c0_20, %c0_21] : memref<1x32xf32, #tpu.memory_space<vmem>>, vector<1x32xf32>
      %25 = vector.broadcast %24 : vector<1x32xf32> to vector<16x32xf32>
      %26 = arith.subf %19, %25 : vector<16x32xf32>
      %27 = vector.broadcast %23 : vector<1x32xf32> to vector<16x32xf32>
      %28 = arith.mulf %26, %27 : vector<16x32xf32>
      %c0_22 = arith.constant 0 : index
      %c0_23 = arith.constant 0 : index
      %29 = vector.load %arg6[%c0_22, %c0_23] : memref<1x32xf32, #tpu.memory_space<vmem>>, vector<1x32xf32>
      %30 = vector.broadcast %29 : vector<1x32xf32> to vector<16x32xf32>
      %31 = arith.mulf %28, %30 : vector<16x32xf32>
      %c0_24 = arith.constant 0 : index
      %c0_25 = arith.constant 0 : index
      %32 = vector.load %arg7[%c0_24, %c0_25] : memref<1x32xf32, #tpu.memory_space<vmem>>, vector<1x32xf32>
      %33 = vector.broadcast %32 : vector<1x32xf32> to vector<16x32xf32>
      %34 = arith.addf %31, %33 : vector<16x32xf32>
      %cst_26 = arith.constant 0.000000e+00 : f32
      %35 = vector.broadcast %cst_26 : f32 to vector<16x32xf32>
      %36 = arith.maximumf %34, %35 : vector<16x32xf32>
      %37 = arith.truncf %36 : vector<16x32xf32> to vector<16x32xbf16>
      %c0_27 = arith.constant 0 : index
      %c0_28 = arith.constant 0 : index
      %38 = vector.load %arg10[%c0_27, %c0_28] : memref<32x32xbf16, #tpu.memory_space<vmem>>, vector<32x32xbf16>
      %cst_29 = arith.constant dense<0.000000e+00> : vector<16x32xf32>
      %39 = tpu.matmul %37, %38, %cst_29 {dimension_numbers = #tpu.dot_dimension_numbers<[1], [0], [0], [1], [0, 0, 1, 1], [], []>} : vector<16x32xbf16>, vector<32x32xbf16>, vector<16x32xf32> -> vector<16x32xf32>
      %c0_30 = arith.constant 0 : index
      %c0_31 = arith.constant 0 : index
      %40 = vector.load %arg13[%c0_30, %c0_31] : memref<1x32xf32, #tpu.memory_space<vmem>>, vector<1x32xf32>
      %41 = vector.broadcast %40 : vector<1x32xf32> to vector<16x32xf32>
      %42 = arith.addf %39, %41 : vector<16x32xf32>
      %c0_32 = arith.constant 0 : index
      %c0_33 = arith.constant 0 : index
      %43 = vector.load %arg16[%c0_32, %c0_33] : memref<16x32xf32, #tpu.memory_space<vmem>>, vector<16x32xf32>
      tpu.vector_store %arg16[%c0_32, %c0_33], %42 {strides = array<i32>} : memref<16x32xf32, #tpu.memory_space<vmem>>, vector<16x32xf32>,
      %c0_34 = arith.constant 0 : index
      %c0_35 = arith.constant 0 : index
      %44 = vector.load %arg11[%c0_34, %c0_35] : memref<32x32xbf16, #tpu.memory_space<vmem>>, vector<32x32xbf16>
      %cst_36 = arith.constant dense<0.000000e+00> : vector<16x32xf32>
      %45 = tpu.matmul %37, %44, %cst_36 {dimension_numbers = #tpu.dot_dimension_numbers<[1], [0], [0], [1], [0, 0, 1, 1], [], []>} : vector<16x32xbf16>, vector<32x32xbf16>, vector<16x32xf32> -> vector<16x32xf32>
      %c0_37 = arith.constant 0 : index
      %c0_38 = arith.constant 0 : index
      %46 = vector.load %arg14[%c0_37, %c0_38] : memref<1x32xf32, #tpu.memory_space<vmem>>, vector<1x32xf32>
      %47 = vector.broadcast %46 : vector<1x32xf32> to vector<16x32xf32>
      %48 = arith.addf %45, %47 : vector<16x32xf32>
      %c0_39 = arith.constant 0 : index
      %c0_40 = arith.constant 0 : index
      %49 = vector.load %arg17[%c0_39, %c0_40] : memref<16x32xf32, #tpu.memory_space<vmem>>, vector<16x32xf32>
      tpu.vector_store %arg17[%c0_39, %c0_40], %48 {strides = array<i32>} : memref<16x32xf32, #tpu.memory_space<vmem>>, vector<16x32xf32>,
      %c0_41 = arith.constant 0 : index
      %c0_42 = arith.constant 0 : index
      %50 = vector.load %arg12[%c0_41, %c0_42] : memref<32x32xbf16, #tpu.memory_space<vmem>>, vector<32x32xbf16>
      %cst_43 = arith.constant dense<0.000000e+00> : vector<16x32xf32>
      %51 = tpu.matmul %37, %50, %cst_43 {dimension_numbers = #tpu.dot_dimension_numbers<[1], [0], [0], [1], [0, 0, 1, 1], [], []>} : vector<16x32xbf16>, vector<32x32xbf16>, vector<16x32xf32> -> vector<16x32xf32>
      %c0_44 = arith.constant 0 : index
      %c0_45 = arith.constant 0 : index
      %52 = vector.load %arg15[%c0_44, %c0_45] : memref<1x32xf32, #tpu.memory_space<vmem>>, vector<1x32xf32>
      %53 = vector.broadcast %52 : vector<1x32xf32> to vector<16x32xf32>
      %54 = arith.addf %51, %53 : vector<16x32xf32>
      %c0_46 = arith.constant 0 : index
      %c0_47 = arith.constant 0 : index
      %55 = vector.load %arg18[%c0_46, %c0_47] : memref<16x32xf32, #tpu.memory_space<vmem>>, vector<16x32xf32>
      tpu.vector_store %arg18[%c0_46, %c0_47], %54 {strides = array<i32>} : memref<16x32xf32, #tpu.memory_space<vmem>>, vector<16x32xf32>,
    } else {
    }
    return
  }
  func.func @transform_0(%arg0: i32, %arg1: i32) -> (i32, i32) {
    %c0_i32 = arith.constant 0 : i32
    return %arg0, %arg1 : i32, i32
  }
  func.func @transform_1(%arg0: i32, %arg1: i32) -> (i32, i32) {
    %c0_i32 = arith.constant 0 : i32
    %c0_i32_0 = arith.constant 0 : i32
    return %arg1, %c0_i32 : i32, i32
  }
  func.func @transform_2(%arg0: i32, %arg1: i32) -> (i32, i32) {
    %c0_i32 = arith.constant 0 : i32
    %c0_i32_0 = arith.constant 0 : i32
    %c0_i32_1 = arith.constant 0 : i32
    return %c0_i32, %c0_i32_0 : i32, i32
  }
  func.func @transform_3(%arg0: i32, %arg1: i32) -> (i32, i32) {
    %c0_i32 = arith.constant 0 : i32
    %c0_i32_0 = arith.constant 0 : i32
    %c0_i32_1 = arith.constant 0 : i32
    return %c0_i32, %c0_i32_0 : i32, i32
  }
  func.func @transform_4(%arg0: i32, %arg1: i32) -> (i32, i32) {
    %c0_i32 = arith.constant 0 : i32
    %c0_i32_0 = arith.constant 0 : i32
    %c0_i32_1 = arith.constant 0 : i32
    return %c0_i32, %c0_i32_0 : i32, i32
  }
  func.func @transform_5(%arg0: i32, %arg1: i32) -> (i32, i32) {
    %c0_i32 = arith.constant 0 : i32
    %c0_i32_0 = arith.constant 0 : i32
    %c0_i32_1 = arith.constant 0 : i32
    return %c0_i32, %c0_i32_0 : i32, i32
  }
  func.func @transform_6(%arg0: i32, %arg1: i32) -> (i32, i32) {
    %c0_i32 = arith.constant 0 : i32
    %c0_i32_0 = arith.constant 0 : i32
    %c0_i32_1 = arith.constant 0 : i32
    return %c0_i32, %c0_i32_0 : i32, i32
  }
  func.func @transform_7(%arg0: i32, %arg1: i32) -> (i32, i32) {
    %c0_i32 = arith.constant 0 : i32
    %c0_i32_0 = arith.constant 0 : i32
    %c0_i32_1 = arith.constant 0 : i32
    return %c0_i32, %c0_i32_0 : i32, i32
  }
  func.func @transform_8(%arg0: i32, %arg1: i32) -> (i32, i32) {
    %c0_i32 = arith.constant 0 : i32
    %c0_i32_0 = arith.constant 0 : i32
    %c0_i32_1 = arith.constant 0 : i32
    return %c0_i32, %c0_i32_0 : i32, i32
  }
  func.func @transform_9(%arg0: i32, %arg1: i32) -> (i32, i32) {
    %c0_i32 = arith.constant 0 : i32
    %c0_i32_0 = arith.constant 0 : i32
    %c0_i32_1 = arith.constant 0 : i32
    return %c0_i32, %c0_i32_0 : i32, i32
  }
  func.func @transform_10(%arg0: i32, %arg1: i32) -> (i32, i32) {
    %c0_i32 = arith.constant 0 : i32
    %c0_i32_0 = arith.constant 0 : i32
    %c0_i32_1 = arith.constant 0 : i32
    return %c0_i32, %c0_i32_0 : i32, i32
  }
  func.func @transform_11(%arg0: i32, %arg1: i32) -> (i32, i32) {
    %c0_i32 = arith.constant 0 : i32
    %c0_i32_0 = arith.constant 0 : i32
    %c0_i32_1 = arith.constant 0 : i32
    return %c0_i32, %c0_i32_0 : i32, i32
  }
  func.func @transform_12(%arg0: i32, %arg1: i32) -> (i32, i32) {
    %c0_i32 = arith.constant 0 : i32
    %c0_i32_0 = arith.constant 0 : i32
    %c0_i32_1 = arith.constant 0 : i32
    return %c0_i32, %c0_i32_0 : i32, i32
  }
  func.func @transform_13(%arg0: i32, %arg1: i32) -> (i32, i32) {
    %c0_i32 = arith.constant 0 : i32
    %c0_i32_0 = arith.constant 0 : i32
    %c0_i32_1 = arith.constant 0 : i32
    return %c0_i32, %c0_i32_0 : i32, i32
  }
  func.func @transform_14(%arg0: i32, %arg1: i32) -> (i32, i32) {
    %c0_i32 = arith.constant 0 : i32
    %c0_i32_0 = arith.constant 0 : i32
    return %arg0, %c0_i32 : i32, i32
  }
  func.func @transform_15(%arg0: i32, %arg1: i32) -> (i32, i32) {
    %c0_i32 = arith.constant 0 : i32
    %c0_i32_0 = arith.constant 0 : i32
    return %arg0, %c0_i32 : i32, i32
  }
  func.func @transform_16(%arg0: i32, %arg1: i32) -> (i32, i32) {
    %c0_i32 = arith.constant 0 : i32
    %c0_i32_0 = arith.constant 0 : i32
    return %arg0, %c0_i32 : i32, i32
  }
}

</mosaic_0001>

<llo_original>
// kernel: tpu_custom_call.1
$region0: #{tpu_custom_call.1}
  #allocation0 [shape = 'u32[]', space=smem, size = 0x4, offset = 0x4, fixed_abs, tag = 'smem constant byte address 0x4 - core index']
  #allocation1 [shape = 'u32[144,128]{1,0:T(1,128)}', space=vmem, size = 0x12000, scoped, tag = 'internal scratch']
  #allocation2 [shape = 'f32[16,8]{1,0:T(8,128)}', space=vmem, size = 0x2000, scoped, tag = 'scratch operand']
  %s0 = inlined_call_operand.hbm [shape: bf16[16,16], index: 0, kind: input, shape index: {}]
  %s1 = inlined_call_operand.vmem [shape: f32[16,8], index: 1, kind: input, shape index: {}]
  %s2 = inlined_call_operand.hbm [shape: bf16[8,32], index: 2, kind: input, shape index: {}]
  %s3 = inlined_call_operand.vmem [shape: f32[1,32], index: 3, kind: input, shape index: {}]
  %s4 = inlined_call_operand.vmem [shape: f32[1,32], index: 4, kind: input, shape index: {}]
  %s5 = inlined_call_operand.hbm [shape: f32[1,32], index: 5, kind: input, shape index: {}]
  %s6 = inlined_call_operand.hbm [shape: f32[1,32], index: 6, kind: input, shape index: {}]
  %s7 = inlined_call_operand.hbm [shape: f32[1,32], index: 7, kind: input, shape index: {}]
  %s8 = inlined_call_operand.vmem [shape: bf16[32,32], index: 8, kind: input, shape index: {}]
  %s9 = inlined_call_operand.vmem [shape: bf16[32,32], index: 9, kind: input, shape index: {}]
  %s10 = inlined_call_operand.vmem [shape: bf16[32,32], index: 10, kind: input, shape index: {}]
  %s11 = inlined_call_operand.vmem [shape: f32[1,32], index: 11, kind: input, shape index: {}]
  %s12 = inlined_call_operand.vmem [shape: f32[1,32], index: 12, kind: input, shape index: {}]
  %s13 = inlined_call_operand.vmem [shape: f32[1,32], index: 13, kind: input, shape index: {}]
  %s14 = inlined_call_operand.hbm [shape: f32[16,32], index: 14, kind: output, shape index: {0}]
  %s15 = inlined_call_operand.hbm [shape: f32[16,32], index: 15, kind: output, shape index: {1}]
  %s16 = inlined_call_operand.hbm [shape: f32[16,32], index: 16, kind: output, shape index: {2}]
  %17 = xla_tuple %s14, %s15, %s16
  %s18 = sld [smem:[#allocation0]]
  $region110: #{tpu_custom_call.1} parent=0
    _
  %s20 = ssub.s32 1, %s18
  %s21 = scalar_select 0, %s20, %s18
  $region1: #{tpu_custom_call.1} parent=0
    #allocation3 [shape = 'u8[4096]{0}', space=vmem, size = 0x1000, scoped, tag = 'input window, operand 0, single buffered']
    #allocation4 [shape = 's32[1]{0}', space=sflag, size = 0x4, scoped, tag = 'scoped memory for tpu_custom_call.1']
    #allocation5 [shape = 's32[1]{0}', space=sflag, size = 0x4, scoped, tag = 'scoped memory for tpu_custom_call.1']
    #allocation6 [shape = 'u8[2048]{0}', space=vmem, size = 0x800, scoped, tag = 'input window, operand 2, single buffered']
    #allocation7 [shape = 's32[1]{0}', space=sflag, size = 0x4, scoped, tag = 'scoped memory for tpu_custom_call.1']
    #allocation8 [shape = 'u8[512]{0}', space=vmem, size = 0x400, scoped, tag = 'input window, operand 5, single buffered']
    #allocation9 [shape = 'u8[512]{0}', space=vmem, size = 0x400, scoped, tag = 'input window, operand 6, single buffered']
    #allocation10 [shape = 's32[1]{0}', space=sflag, size = 0x4, scoped, tag = 'scoped memory for tpu_custom_call.1']
    #allocation11 [shape = 'u8[512]{0}', space=vmem, size = 0x400, scoped, tag = 'input window, operand 7, single buffered']
    #allocation12 [shape = 'u8[8192]{0}', space=vmem, size = 0x2000, scoped, tag = 'output window, operand 0, single buffered']
    #allocation13 [shape = 'u8[8192]{0}', space=vmem, size = 0x2000, scoped, tag = 'output window, operand 1, single buffered']
    #allocation14 [shape = 's32[1]{0}', space=sflag, size = 0x4, scoped, tag = 'scoped memory for tpu_custom_call.1']
    #allocation15 [shape = 'u8[8192]{0}', space=vmem, size = 0x2000, scoped, tag = 'output window, operand 2, single buffered']
    %22 = vsyncpa [#allocation4], 0
    %23 = vsyncpa [#allocation7], 0
    %24 = vsyncpa [#allocation10], 0
    %25 = vsyncpa [#allocation5], 0
    %26 = vsyncpa [#allocation14], 0
    // Predicated region
    $region2: #{tpu_custom_call.1} parent=1 // pred_check
      _
    $region3: #{tpu_custom_call.1} parent=1 // pred_check_branch
      %28 = sbr.rel (0) target = $region5
    $region4: #{tpu_custom_call.1} parent=1 // pred_region
      %s30 = ssub.s32 128, 128
      %31 = vsyncadd [#allocation4], %s30
      %s32 = sshll.u32 [#allocation3], 4
      %s33 = int_to_ptr.vmem [resolvable:$true] %s32
      %38 = dma.hbm_to_vmem [thread:$0]  %s0, 128, %s33, [#allocation4], 64, 64, 4
    $region5: #{tpu_custom_call.1} parent=1 // pred_fallthru
      _
    // Predicated region
    $region6: #{tpu_custom_call.1} parent=1 // pred_check
      _
    $region7: #{tpu_custom_call.1} parent=1 // pred_check_branch
      %40 = sbr.rel (0) target = $region9
    $region8: #{tpu_custom_call.1} parent=1 // pred_region
      _
    $region9: #{tpu_custom_call.1} parent=1 // pred_fallthru
      _
    // Predicated region
    $region10: #{tpu_custom_call.1} parent=1 // pred_check
      _
    $region11: #{tpu_custom_call.1} parent=1 // pred_check_branch
      %42 = sbr.rel (0) target = $region13
    $region12: #{tpu_custom_call.1} parent=1 // pred_region
      %s44 = ssub.s32 64, 64
      %45 = vsyncadd [#allocation7], %s44
      %s47 = sshll.u32 [#allocation6], 4
      %s48 = int_to_ptr.vmem [resolvable:$true] %s47
      %50 = dma.hbm_to_vmem [thread:$0]  %s2, 64, %s48, [#allocation7]
    $region13: #{tpu_custom_call.1} parent=1 // pred_fallthru
      _
    // Predicated region
    $region14: #{tpu_custom_call.1} parent=1 // pred_check
      _
    $region15: #{tpu_custom_call.1} parent=1 // pred_check_branch
      %52 = sbr.rel (0) target = $region17
    $region16: #{tpu_custom_call.1} parent=1 // pred_region
      _
    $region17: #{tpu_custom_call.1} parent=1 // pred_fallthru
      _
    // Predicated region
    $region18: #{tpu_custom_call.1} parent=1 // pred_check
      _
    $region19: #{tpu_custom_call.1} parent=1 // pred_check_branch
      %54 = sbr.rel (0) target = $region21
    $region20: #{tpu_custom_call.1} parent=1 // pred_region
      _
    $region21: #{tpu_custom_call.1} parent=1 // pred_fallthru
      _
    // Predicated region
    $region22: #{tpu_custom_call.1} parent=1 // pred_check
      _
    $region23: #{tpu_custom_call.1} parent=1 // pred_check_branch
      %56 = sbr.rel (0) target = $region25
    $region24: #{tpu_custom_call.1} parent=1 // pred_region
      %s58 = ssub.s32 16, 16
      %59 = vsyncadd [#allocation7], %s58
      %s61 = sshll.u32 [#allocation8], 4
      %s62 = int_to_ptr.vmem [resolvable:$true] %s61
      %64 = dma.hbm_to_vmem [thread:$0]  %s5, 16, %s62, [#allocation7]
    $region25: #{tpu_custom_call.1} parent=1 // pred_fallthru
      _
    // Predicated region
    $region26: #{tpu_custom_call.1} parent=1 // pred_check
      _
    $region27: #{tpu_custom_call.1} parent=1 // pred_check_branch
      %66 = sbr.rel (0) target = $region29
    $region28: #{tpu_custom_call.1} parent=1 // pred_region
      %s68 = ssub.s32 16, 16
      %69 = vsyncadd [#allocation10], %s68
      %s71 = sshll.u32 [#allocation9], 4
      %s72 = int_to_ptr.vmem [resolvable:$true] %s71
      %74 = dma.hbm_to_vmem [thread:$0]  %s6, 16, %s72, [#allocation10]
    $region29: #{tpu_custom_call.1} parent=1 // pred_fallthru
      _
    // Predicated region
    $region30: #{tpu_custom_call.1} parent=1 // pred_check
      _
    $region31: #{tpu_custom_call.1} parent=1 // pred_check_branch
      %76 = sbr.rel (0) target = $region33
    $region32: #{tpu_custom_call.1} parent=1 // pred_region
      %s78 = ssub.s32 16, 16
      %79 = vsyncadd [#allocation10], %s78
      %s81 = sshll.u32 [#allocation11], 4
      %s82 = int_to_ptr.vmem [resolvable:$true] %s81
      %84 = dma.hbm_to_vmem [thread:$0]  %s7, 16, %s82, [#allocation10]
    $region33: #{tpu_custom_call.1} parent=1 // pred_fallthru
      _
    // Predicated region
    $region34: #{tpu_custom_call.1} parent=1 // pred_check
      _
    $region35: #{tpu_custom_call.1} parent=1 // pred_check_branch
      %86 = sbr.rel (0) target = $region37
    $region36: #{tpu_custom_call.1} parent=1 // pred_region
      _
    $region37: #{tpu_custom_call.1} parent=1 // pred_fallthru
      _
    // Predicated region
    $region38: #{tpu_custom_call.1} parent=1 // pred_check
      _
    $region39: #{tpu_custom_call.1} parent=1 // pred_check_branch
      %88 = sbr.rel (0) target = $region41
    $region40: #{tpu_custom_call.1} parent=1 // pred_region
      _
    $region41: #{tpu_custom_call.1} parent=1 // pred_fallthru
      _
    // Predicated region
    $region42: #{tpu_custom_call.1} parent=1 // pred_check
      _
    $region43: #{tpu_custom_call.1} parent=1 // pred_check_branch
      %90 = sbr.rel (0) target = $region45
    $region44: #{tpu_custom_call.1} parent=1 // pred_region
      _
    $region45: #{tpu_custom_call.1} parent=1 // pred_fallthru
      _
    // Predicated region
    $region46: #{tpu_custom_call.1} parent=1 // pred_check
      _
    $region47: #{tpu_custom_call.1} parent=1 // pred_check_branch
      %92 = sbr.rel (0) target = $region49
    $region48: #{tpu_custom_call.1} parent=1 // pred_region
      _
    $region49: #{tpu_custom_call.1} parent=1 // pred_fallthru
      _
    // Predicated region
    $region50: #{tpu_custom_call.1} parent=1 // pred_check
      _
    $region51: #{tpu_custom_call.1} parent=1 // pred_check_branch
      %94 = sbr.rel (0) target = $region53
    $region52: #{tpu_custom_call.1} parent=1 // pred_region
      _
    $region53: #{tpu_custom_call.1} parent=1 // pred_fallthru
      _
    // Predicated region
    $region54: #{tpu_custom_call.1} parent=1 // pred_check
      _
    $region55: #{tpu_custom_call.1} parent=1 // pred_check_branch
      %96 = sbr.rel (0) target = $region57
    $region56: #{tpu_custom_call.1} parent=1 // pred_region
      _
    $region57: #{tpu_custom_call.1} parent=1 // pred_fallthru
      _
    // Predicated region
    $region58: #{tpu_custom_call.1} parent=1 // pred_check
      _
    $region59: #{tpu_custom_call.1} parent=1 // pred_check_branch
      %98 = sbr.rel (0) target = $region61
    $region60: #{tpu_custom_call.1} parent=1 // pred_region
      %99 = dma.done [#allocation4], 128
    $region61: #{tpu_custom_call.1} parent=1 // pred_fallthru
      _
    // Predicated region
    $region62: #{tpu_custom_call.1} parent=1 // pred_check
      _
    $region63: #{tpu_custom_call.1} parent=1 // pred_check_branch
      %101 = sbr.rel (0) target = $region65
    $region64: #{tpu_custom_call.1} parent=1 // pred_region
      %102 = dma.done [#allocation7], 64
    $region65: #{tpu_custom_call.1} parent=1 // pred_fallthru
      _
    // Predicated region
    $region66: #{tpu_custom_call.1} parent=1 // pred_check
      _
    $region67: #{tpu_custom_call.1} parent=1 // pred_check_branch
      %104 = sbr.rel (0) target = $region69
    $region68: #{tpu_custom_call.1} parent=1 // pred_region
      %105 = dma.done [#allocation7], 16
    $region69: #{tpu_custom_call.1} parent=1 // pred_fallthru
      _
    // Predicated region
    $region70: #{tpu_custom_call.1} parent=1 // pred_check
      _
    $region71: #{tpu_custom_call.1} parent=1 // pred_check_branch
      %107 = sbr.rel (0) target = $region73
    $region72: #{tpu_custom_call.1} parent=1 // pred_region
      %108 = dma.done [#allocation10], 16
    $region73: #{tpu_custom_call.1} parent=1 // pred_fallthru
      _
    // Predicated region
    $region74: #{tpu_custom_call.1} parent=1 // pred_check
      _
    $region75: #{tpu_custom_call.1} parent=1 // pred_check_branch
      %110 = sbr.rel (0) target = $region77
    $region76: #{tpu_custom_call.1} parent=1 // pred_region
      %111 = dma.done [#allocation10], 16
    $region77: #{tpu_custom_call.1} parent=1 // pred_fallthru
      _
    %p113 = scmp.eq.s32.totalorder 0, 0
    // Predicated region
    $region78: #{tpu_custom_call.1} parent=1 // pred_check
      %p114 = pneg %p113
    $region79: #{tpu_custom_call.1} parent=1 // pred_check_branch
      %116 = sbr.rel (%p114) target = $region81
    $region80: #{tpu_custom_call.1} parent=1 // pred_region
      %vm117 = vcmask 64512
      %118 = vst.msk [vmem:[#allocation2] sm:$0xff] %vm117, 0.0
      %119 = vst.msk [vmem:[#allocation2 + $0x8] sm:$0xff] %vm117, 0.0
    $region81: #{tpu_custom_call.1} parent=1 // pred_fallthru
      _
    %v120 = vld [vmem:[#allocation2] sm:$0xff]
    %v121 = vld [vmem:[#allocation2 + $0x8] sm:$0xff]
    %v122 = vld [vmem:[#allocation3] sm:$0xf]
    %v123 = vld [vmem:[#allocation3 + $0x4] sm:$0xf]
    %v124 = vld [vmem:[%s1] sm:$0xff]
    %v125 = vld [vmem:[%s1 + $0x8] sm:$0xff]
    %v126 = vpack.c.bf16 %v125, %v124
    %v129 = vunpack.c.l.b16 %v122
    %v130 = vunpack.c.l.b16 %v123
    %v131 = vpack.c.b16 %v130, %v129
    %vm132 = vcmask 130048
    %v134 = vsel %vm132, %v131, 0
    %136 = vmatprep.subr.bf16.mxu0 0
    %137 = vmatpush1.bf16.msra.mxu0 %v126
    %138 = vmatprep.subr.bf16.mxu0 0
    %139 = vmatpush1.bf16.msra.mxu0 0
    %140 = vmatprep.subr.bf16.mxu0 0
    %141 = vmatpush1.bf16.msra.mxu0 0
    %142 = vmatprep.subr.bf16.mxu0 0
    %143 = vmatpush1.bf16.msra.mxu0 0
    %144 = vmatprep.subr.bf16.mxu0 0
    %145 = vmatpush1.bf16.msra.mxu0 0
    %146 = vmatprep.subr.bf16.mxu0 0
    %147 = vmatpush1.bf16.msra.mxu0 0
    %148 = vmatprep.subr.bf16.mxu0 0
    %149 = vmatpush1.bf16.msra.mxu0 0
    %150 = vmatprep.subr.bf16.mxu0 0
    %151 = vmatpush1.bf16.msra.mxu0 0
    %152 = vmatprep.subr.bf16.mxu0 0
    %153 = vmatpush1.bf16.msra.mxu0 0
    %154 = vmatprep.subr.bf16.mxu0 0
    %155 = vmatpush1.bf16.msra.mxu0 0
    %156 = vmatprep.subr.bf16.mxu0 0
    %157 = vmatpush1.bf16.msra.mxu0 0
    %158 = vmatprep.subr.bf16.mxu0 0
    %159 = vmatpush1.bf16.msra.mxu0 0
    %160 = vmatprep.subr.bf16.mxu0 0
    %161 = vmatpush1.bf16.msra.mxu0 0
    %162 = vmatprep.subr.bf16.mxu0 0
    %163 = vmatpush1.bf16.msra.mxu0 0
    %164 = vmatprep.subr.bf16.mxu0 0
    %165 = vmatpush1.bf16.msra.mxu0 0
    %166 = vmatprep.subr.bf16.mxu0 0
    %167 = vmatpush1.bf16.msra.mxu0 0
    %168 = vmatprep.mubr.bf16.mxu0 0
    %169 = vmatmul.mubr.bf16.gmra.mrb[0].mxu0 %v134
    %v170 = vpop.f32.mrb[0].mxu0
    %v171 = vadd.f32 0.0, %v170
    %v172 = vpop.f32.mrb[0].mxu0
    %v173 = vpop.f32.mrb[0].mxu0
    %v174 = vadd.f32 0.0, %v173
    %v175 = vpop.f32.mrb[0].mxu0
    %176 = vdwg.mxu0
    %v177 = vadd.f32 %v120, %v171
    %v178 = vadd.f32 %v121, %v174
    %vm179 = vcmask 64512
    %180 = vst.msk [vmem:[#allocation2] sm:$0xff] %vm179, %v177
    %181 = vst.msk [vmem:[#allocation2 + $0x8] sm:$0xff] %vm179, %v178
    // Predicated region
    $region82: #{tpu_custom_call.1} parent=1 // pred_check
      %p182 = pneg %p113
    $region83: #{tpu_custom_call.1} parent=1 // pred_check_branch
      %184 = sbr.rel (%p182) target = $region85
    $region84: #{tpu_custom_call.1} parent=1 // pred_region
      %v185 = vld [vmem:[#allocation2] sm:$0xff]
      %v186 = vld [vmem:[#allocation2 + $0x8] sm:$0xff]
      %v187 = vpack.c.bf16 %v186, %v185
      %v188 = vld [vmem:[#allocation6] sm:$0xf]
      %v189 = vld [vmem:[%s3] sm:$0x1]
      %v191 = vlaneseq
      %v192 = vshrl.u32 %v191, 7
      %v193 = vsub.s32 0, %v192
      %v194 = vrot.slane %v189, %v193
      %v197 = vsel %vm179, %v187, 0
      %vm199 = vcmask 1043456
      %v201 = vsel %vm199, %v188, 0
      %203 = vmatprep.subr.bf16.mxu0 0
      %204 = vmatpush1.bf16.msra.mxu0 %v201
      %205 = vmatprep.subr.bf16.mxu0 0
      %206 = vmatpush1.bf16.msra.mxu0 0
      %207 = vmatprep.subr.bf16.mxu0 0
      %208 = vmatpush1.bf16.msra.mxu0 0
      %209 = vmatprep.subr.bf16.mxu0 0
      %210 = vmatpush1.bf16.msra.mxu0 0
      %211 = vmatprep.subr.bf16.mxu0 0
      %212 = vmatpush1.bf16.msra.mxu0 0
      %213 = vmatprep.subr.bf16.mxu0 0
      %214 = vmatpush1.bf16.msra.mxu0 0
      %215 = vmatprep.subr.bf16.mxu0 0
      %216 = vmatpush1.bf16.msra.mxu0 0
      %217 = vmatprep.subr.bf16.mxu0 0
      %218 = vmatpush1.bf16.msra.mxu0 0
      %219 = vmatprep.subr.bf16.mxu0 0
      %220 = vmatpush1.bf16.msra.mxu0 0
      %221 = vmatprep.subr.bf16.mxu0 0
      %222 = vmatpush1.bf16.msra.mxu0 0
      %223 = vmatprep.subr.bf16.mxu0 0
      %224 = vmatpush1.bf16.msra.mxu0 0
      %225 = vmatprep.subr.bf16.mxu0 0
      %226 = vmatpush1.bf16.msra.mxu0 0
      %227 = vmatprep.subr.bf16.mxu0 0
      %228 = vmatpush1.bf16.msra.mxu0 0
      %229 = vmatprep.subr.bf16.mxu0 0
      %230 = vmatpush1.bf16.msra.mxu0 0
      %231 = vmatprep.subr.bf16.mxu0 0
      %232 = vmatpush1.bf16.msra.mxu0 0
      %233 = vmatprep.subr.bf16.mxu0 0
      %234 = vmatpush1.bf16.msra.mxu0 0
      %235 = vmatprep.mubr.bf16.mxu0 0
      %236 = vmatmul.mubr.bf16.gmra.mrb[0].mxu0 %v197
      %v237 = vpop.f32.mrb[0].mxu0
      %v238 = vadd.f32 %v194, %v237
      %v239 = vpop.f32.mrb[0].mxu0
      %v240 = vpop.f32.mrb[0].mxu0
      %v241 = vadd.f32 %v194, %v240
      %v242 = vpop.f32.mrb[0].mxu0
      %243 = vdwg.mxu0
      %v244 = vld [vmem:[#allocation11] sm:$0x1]
      %v245 = vadd.f32 %v244, 1e-05
      %v246 = vrsqrt.pop %v245
      %v247 = vld [vmem:[#allocation9] sm:$0x1]
      %v249 = vlaneseq
      %v250 = vshrl.u32 %v249, 7
      %v251 = vsub.s32 0, %v250
      %v252 = vrot.slane %v247, %v251
      %v254 = vsub.f32 %v238, %v252
      %v255 = vsub.f32 %v241, %v252
      %v257 = vlaneseq
      %v258 = vshrl.u32 %v257, 7
      %v259 = vsub.s32 0, %v258
      %v260 = vrot.slane %v246, %v259
      %v262 = vmul.f32 %v254, %v260
      %v263 = vmul.f32 %v255, %v260
      %v264 = vld [vmem:[%s4] sm:$0x1]
      %v266 = vlaneseq
      %v267 = vshrl.u32 %v266, 7
      %v268 = vsub.s32 0, %v267
      %v269 = vrot.slane %v264, %v268
      %v271 = vmul.f32 %v262, %v269
      %v272 = vmul.f32 %v263, %v269
      %v273 = vld [vmem:[#allocation8] sm:$0x1]
      %v275 = vlaneseq
      %v276 = vshrl.u32 %v275, 7
      %v277 = vsub.s32 0, %v276
      %v278 = vrot.slane %v273, %v277
      %v280 = vadd.f32 %v271, %v278
      %v281 = vadd.f32 %v272, %v278
      %v282 = vmax.f32 %v280, 0.0
      %v283 = vmax.f32 %v281, 0.0
      %v284 = vpack.c.bf16 %v283, %v282
      %v285 = vld [vmem:[%s8] sm:$0xf]
      %v286 = vld [vmem:[%s8 + $0x4] sm:$0xf]
      %v287 = vld [vmem:[%s8 + $0x8] sm:$0xf]
      %v288 = vld [vmem:[%s8 + $0xc] sm:$0xf]
      %v289 = vld [vmem:[%s11] sm:$0x1]
      %v291 = vlaneseq
      %v292 = vshrl.u32 %v291, 7
      %v293 = vsub.s32 0, %v292
      %v294 = vrot.slane %v289, %v293
      %v300 = vunpack.c.l.b16 %v285
      %v301 = vunpack.c.l.b16 %v286
      %v302 = vunpack.c.l.b16 %v287
      %v303 = vunpack.c.l.b16 %v288
      %v304 = vpack.c.b16 %v301, %v300
      %v305 = vpack.c.b16 %v303, %v302
      %vm308 = vcmask 261120
      %v310 = vsel %vm308, %v284, 0
      %312 = vmatprep.subr.bf16.mxu0 0
      %313 = vmatpush1.bf16.msra.mxu0 %v304
      %314 = vmatprep.subr.bf16.mxu0 0
      %315 = vmatpush1.bf16.msra.mxu0 %v305
      %316 = vmatprep.subr.bf16.mxu0 0
      %317 = vmatpush1.bf16.msra.mxu0 0
      %318 = vmatprep.subr.bf16.mxu0 0
      %319 = vmatpush1.bf16.msra.mxu0 0
      %320 = vmatprep.subr.bf16.mxu0 0
      %321 = vmatpush1.bf16.msra.mxu0 0
      %322 = vmatprep.subr.bf16.mxu0 0
      %323 = vmatpush1.bf16.msra.mxu0 0
      %324 = vmatprep.subr.bf16.mxu0 0
      %325 = vmatpush1.bf16.msra.mxu0 0
      %326 = vmatprep.subr.bf16.mxu0 0
      %327 = vmatpush1.bf16.msra.mxu0 0
      %328 = vmatprep.subr.bf16.mxu0 0
      %329 = vmatpush1.bf16.msra.mxu0 0
      %330 = vmatprep.subr.bf16.mxu0 0
      %331 = vmatpush1.bf16.msra.mxu0 0
      %332 = vmatprep.subr.bf16.mxu0 0
      %333 = vmatpush1.bf16.msra.mxu0 0
      %334 = vmatprep.subr.bf16.mxu0 0
      %335 = vmatpush1.bf16.msra.mxu0 0
      %336 = vmatprep.subr.bf16.mxu0 0
      %337 = vmatpush1.bf16.msra.mxu0 0
      %338 = vmatprep.subr.bf16.mxu0 0
      %339 = vmatpush1.bf16.msra.mxu0 0
      %340 = vmatprep.subr.bf16.mxu0 0
      %341 = vmatpush1.bf16.msra.mxu0 0
      %342 = vmatprep.subr.bf16.mxu0 0
      %343 = vmatpush1.bf16.msra.mxu0 0
      %344 = vmatprep.mubr.bf16.mxu0 0
      %345 = vmatmul.mubr.bf16.gmra.mrb[0].mxu0 %v310
      %v346 = vpop.f32.mrb[0].mxu0
      %v347 = vadd.f32 %v294, %v346
      %v348 = vpop.f32.mrb[0].mxu0
      %v349 = vpop.f32.mrb[0].mxu0
      %v350 = vadd.f32 %v294, %v349
      %v351 = vpop.f32.mrb[0].mxu0
      %352 = vdwg.mxu0
      %353 = vst.msk [vmem:[#allocation12] sm:$0xff] %vm308, %v347
      %354 = vst.msk [vmem:[#allocation12 + $0x8] sm:$0xff] %vm308, %v350
      %v355 = vld [vmem:[%s9] sm:$0xf]
      %v356 = vld [vmem:[%s9 + $0x4] sm:$0xf]
      %v357 = vld [vmem:[%s9 + $0x8] sm:$0xf]
      %v358 = vld [vmem:[%s9 + $0xc] sm:$0xf]
      %v359 = vld [vmem:[%s12] sm:$0x1]
      %v361 = vlaneseq
      %v362 = vshrl.u32 %v361, 7
      %v363 = vsub.s32 0, %v362
      %v364 = vrot.slane %v359, %v363
      %v370 = vunpack.c.l.b16 %v355
      %v371 = vunpack.c.l.b16 %v356
      %v372 = vunpack.c.l.b16 %v357
      %v373 = vunpack.c.l.b16 %v358
      %v374 = vpack.c.b16 %v371, %v370
      %v375 = vpack.c.b16 %v373, %v372
      %378 = vmatprep.subr.bf16.mxu0 0
      %379 = vmatpush1.bf16.msra.mxu0 %v374
      %380 = vmatprep.subr.bf16.mxu0 0
      %381 = vmatpush1.bf16.msra.mxu0 %v375
      %382 = vmatprep.subr.bf16.mxu0 0
      %383 = vmatpush1.bf16.msra.mxu0 0
      %384 = vmatprep.subr.bf16.mxu0 0
      %385 = vmatpush1.bf16.msra.mxu0 0
      %386 = vmatprep.subr.bf16.mxu0 0
      %387 = vmatpush1.bf16.msra.mxu0 0
      %388 = vmatprep.subr.bf16.mxu0 0
      %389 = vmatpush1.bf16.msra.mxu0 0
      %390 = vmatprep.subr.bf16.mxu0 0
      %391 = vmatpush1.bf16.msra.mxu0 0
      %392 = vmatprep.subr.bf16.mxu0 0
      %393 = vmatpush1.bf16.msra.mxu0 0
      %394 = vmatprep.subr.bf16.mxu0 0
      %395 = vmatpush1.bf16.msra.mxu0 0
      %396 = vmatprep.subr.bf16.mxu0 0
      %397 = vmatpush1.bf16.msra.mxu0 0
      %398 = vmatprep.subr.bf16.mxu0 0
      %399 = vmatpush1.bf16.msra.mxu0 0
      %400 = vmatprep.subr.bf16.mxu0 0
      %401 = vmatpush1.bf16.msra.mxu0 0
      %402 = vmatprep.subr.bf16.mxu0 0
      %403 = vmatpush1.bf16.msra.mxu0 0
      %404 = vmatprep.subr.bf16.mxu0 0
      %405 = vmatpush1.bf16.msra.mxu0 0
      %406 = vmatprep.subr.bf16.mxu0 0
      %407 = vmatpush1.bf16.msra.mxu0 0
      %408 = vmatprep.subr.bf16.mxu0 0
      %409 = vmatpush1.bf16.msra.mxu0 0
      %410 = vmatprep.mubr.bf16.mxu0 0
      %411 = vmatmul.mubr.bf16.gmra.mrb[0].mxu0 %v310
      %v412 = vpop.f32.mrb[0].mxu0
      %v413 = vadd.f32 %v364, %v412
      %v414 = vpop.f32.mrb[0].mxu0
      %v415 = vpop.f32.mrb[0].mxu0
      %v416 = vadd.f32 %v364, %v415
      %v417 = vpop.f32.mrb[0].mxu0
      %418 = vdwg.mxu0
      %419 = vst.msk [vmem:[#allocation13] sm:$0xff] %vm308, %v413
      %420 = vst.msk [vmem:[#allocation13 + $0x8] sm:$0xff] %vm308, %v416
      %v421 = vld [vmem:[%s10] sm:$0xf]
      %v422 = vld [vmem:[%s10 + $0x4] sm:$0xf]
      %v423 = vld [vmem:[%s10 + $0x8] sm:$0xf]
      %v424 = vld [vmem:[%s10 + $0xc] sm:$0xf]
      %v425 = vld [vmem:[%s13] sm:$0x1]
      %v427 = vlaneseq
      %v428 = vshrl.u32 %v427, 7
      %v429 = vsub.s32 0, %v428
      %v430 = vrot.slane %v425, %v429
      %v436 = vunpack.c.l.b16 %v421
      %v437 = vunpack.c.l.b16 %v422
      %v438 = vunpack.c.l.b16 %v423
      %v439 = vunpack.c.l.b16 %v424
      %v440 = vpack.c.b16 %v437, %v436
      %v441 = vpack.c.b16 %v439, %v438
      %444 = vmatprep.subr.bf16.mxu0 0
      %445 = vmatpush1.bf16.msra.mxu0 %v440
      %446 = vmatprep.subr.bf16.mxu0 0
      %447 = vmatpush1.bf16.msra.mxu0 %v441
      %448 = vmatprep.subr.bf16.mxu0 0
      %449 = vmatpush1.bf16.msra.mxu0 0
      %450 = vmatprep.subr.bf16.mxu0 0
      %451 = vmatpush1.bf16.msra.mxu0 0
      %452 = vmatprep.subr.bf16.mxu0 0
      %453 = vmatpush1.bf16.msra.mxu0 0
      %454 = vmatprep.subr.bf16.mxu0 0
      %455 = vmatpush1.bf16.msra.mxu0 0
      %456 = vmatprep.subr.bf16.mxu0 0
      %457 = vmatpush1.bf16.msra.mxu0 0
      %458 = vmatprep.subr.bf16.mxu0 0
      %459 = vmatpush1.bf16.msra.mxu0 0
      %460 = vmatprep.subr.bf16.mxu0 0
      %461 = vmatpush1.bf16.msra.mxu0 0
      %462 = vmatprep.subr.bf16.mxu0 0
      %463 = vmatpush1.bf16.msra.mxu0 0
      %464 = vmatprep.subr.bf16.mxu0 0
      %465 = vmatpush1.bf16.msra.mxu0 0
      %466 = vmatprep.subr.bf16.mxu0 0
      %467 = vmatpush1.bf16.msra.mxu0 0
      %468 = vmatprep.subr.bf16.mxu0 0
      %469 = vmatpush1.bf16.msra.mxu0 0
      %470 = vmatprep.subr.bf16.mxu0 0
      %471 = vmatpush1.bf16.msra.mxu0 0
      %472 = vmatprep.subr.bf16.mxu0 0
      %473 = vmatpush1.bf16.msra.mxu0 0
      %474 = vmatprep.subr.bf16.mxu0 0
      %475 = vmatpush1.bf16.msra.mxu0 0
      %476 = vmatprep.mubr.bf16.mxu0 0
      %477 = vmatmul.mubr.bf16.gmra.mrb[0].mxu0 %v310
      %v478 = vpop.f32.mrb[0].mxu0
      %v479 = vadd.f32 %v430, %v478
      %v480 = vpop.f32.mrb[0].mxu0
      %v481 = vpop.f32.mrb[0].mxu0
      %v482 = vadd.f32 %v430, %v481
      %v483 = vpop.f32.mrb[0].mxu0
      %484 = vdwg.mxu0
      %485 = vst.msk [vmem:[#allocation15] sm:$0xff] %vm308, %v479
      %486 = vst.msk [vmem:[#allocation15 + $0x8] sm:$0xff] %vm308, %v482
    $region85: #{tpu_custom_call.1} parent=1 // pred_fallthru
      _
    // Predicated region
    $region86: #{tpu_custom_call.1} parent=1 // pred_check
      _
    $region87: #{tpu_custom_call.1} parent=1 // pred_check_branch
      %488 = sbr.rel (0) target = $region89
    $region88: #{tpu_custom_call.1} parent=1 // pred_region
      %s490 = ssub.s32 256, 256
      %491 = vsyncadd [#allocation5], %s490
      %s492 = sshll.u32 [#allocation12], 4
      %s493 = int_to_ptr.vmem [resolvable:$true] %s492
      %498 = dma.vmem_to_hbm [thread:$0]  %s493, 256, %s14, [#allocation5], 128, 128, 8
    $region89: #{tpu_custom_call.1} parent=1 // pred_fallthru
      _
    // Predicated region
    $region90: #{tpu_custom_call.1} parent=1 // pred_check
      _
    $region91: #{tpu_custom_call.1} parent=1 // pred_check_branch
      %500 = sbr.rel (0) target = $region93
    $region92: #{tpu_custom_call.1} parent=1 // pred_region
      %s502 = ssub.s32 256, 256
      %503 = vsyncadd [#allocation14], %s502
      %s504 = sshll.u32 [#allocation13], 4
      %s505 = int_to_ptr.vmem [resolvable:$true] %s504
      %510 = dma.vmem_to_hbm [thread:$0]  %s505, 256, %s15, [#allocation14], 128, 128, 8
    $region93: #{tpu_custom_call.1} parent=1 // pred_fallthru
      _
    // Predicated region
    $region94: #{tpu_custom_call.1} parent=1 // pred_check
      _
    $region95: #{tpu_custom_call.1} parent=1 // pred_check_branch
      %512 = sbr.rel (0) target = $region97
    $region96: #{tpu_custom_call.1} parent=1 // pred_region
      %s514 = ssub.s32 256, 256
      %515 = vsyncadd [#allocation14], %s514
      %s516 = sshll.u32 [#allocation15], 4
      %s517 = int_to_ptr.vmem [resolvable:$true] %s516
      %522 = dma.vmem_to_hbm [thread:$0]  %s517, 256, %s16, [#allocation14], 128, 128, 8
    $region97: #{tpu_custom_call.1} parent=1 // pred_fallthru
      _
    // Predicated region
    $region98: #{tpu_custom_call.1} parent=1 // pred_check
      _
    $region99: #{tpu_custom_call.1} parent=1 // pred_check_branch
      %524 = sbr.rel (0) target = $region101
    $region100: #{tpu_custom_call.1} parent=1 // pred_region
      %525 = dma.done [#allocation5], 256
    $region101: #{tpu_custom_call.1} parent=1 // pred_fallthru
      _
    // Predicated region
    $region102: #{tpu_custom_call.1} parent=1 // pred_check
      _
    $region103: #{tpu_custom_call.1} parent=1 // pred_check_branch
      %527 = sbr.rel (0) target = $region105
    $region104: #{tpu_custom_call.1} parent=1 // pred_region
      %528 = dma.done [#allocation14], 256
    $region105: #{tpu_custom_call.1} parent=1 // pred_fallthru
      _
    // Predicated region
    $region106: #{tpu_custom_call.1} parent=1 // pred_check
      _
    $region107: #{tpu_custom_call.1} parent=1 // pred_check_branch
      %530 = sbr.rel (0) target = $region109
    $region108: #{tpu_custom_call.1} parent=1 // pred_region
      %531 = dma.done [#allocation14], 256
    $region109: #{tpu_custom_call.1} parent=1 // pred_fallthru
      _
    %532 = vsyncpa [#allocation4], 1
    %533 = vsyncpa [#allocation7], 1
    %534 = vsyncpa [#allocation10], 1
    %535 = vsyncpa [#allocation5], 1
    %536 = vsyncpa [#allocation14], 1

</llo_original>
